<compile_context>
chip_gen: v5e
topology: v5e:2x2
jax: 0.10.0
libtpu: 0.0.40
codegen_flags: <defaults>
</compile_context>

<pallas_src>
import jax
import jax.numpy as jnp
from jax.experimental import pallas as pl
from jax.experimental.pallas import tpu as pltpu


def reward_kernel(ids_ref, emb_hbm, w_ref, b_ref, o_ref, buf, sem):
    # ids_ref : (M,)      int32  SMEM  scalar-prefetched token ids
    # emb_hbm : (V, H)    f32    HBM   embedding table (left in place)
    # w_ref   : (1, H)    f32    VMEM  folded head weights (W_sft @ W_last)^T
    # b_ref   : (1, 1)    f32    VMEM  folded bias
    # o_ref   : (tm, 1)   f32          per-token reward for this tile
    # buf     : (tm, H)   f32    VMEM  gather landing buffer
    # sem     : DMA semaphore shared by all row copies of this tile
    block_m = buf.shape[0]
    base = pl.program_id(0) * block_m

    # --- fused gather: one row DMA per token of this tile -------------------
    @pl.loop(0, block_m)
    def _(r):
        tok = ids_ref[base + r]
        pltpu.make_async_copy(emb_hbm.at[pl.ds(tok, 1)],
                              buf.at[pl.ds(r, 1)],
                              sem).start()

    # All copies have identical size and share `sem`, so block_m equally-sized
    # waits drain exactly the block_m completions (completion order is
    # irrelevant because we only touch buf after all waits).
    @pl.loop(0, block_m)
    def _(r):
        pltpu.make_async_copy(emb_hbm.at[pl.ds(0, 1)],
                              buf.at[pl.ds(r, 1)],
                              sem).wait()

    # --- folded head: VPU multiply + XLU lane reduction, f32 accumulation ---
    e = buf[...]                                    # (tm, H)
    w = w_ref[...]                                  # (1, H) -> sublane bcast
    r = jnp.sum(e * w, axis=-1, keepdims=True)      # (tm, 1)
    o_ref[...] = r + b_ref[...]                     # (1, 1) broadcast add


def reward_model_forward(x_tokens, params, *, block_m=128):
    """x_tokens: (B, S) int32 token ids -> (B, S, 1) float32 reward."""
    emb, w_sft, b_sft, w_last, b_last = (
        params["emb"], params["w_sft"], params["b_sft"],
        params["w_last"], params["b_last"],
    )
    B, S = x_tokens.shape
    V, H = emb.shape
    M = B * S

    # --- algebraic head folding (exact: no nonlinearity in between) --------
    w_eff = (w_sft @ w_last).reshape(1, H)          # (1, H) f32
    b_eff = b_sft @ w_last + b_last                 # (1, 1) f32

    ids = x_tokens.reshape(-1).astype(jnp.int32)    # (M,) scalar-prefetch arg

    if M % block_m != 0:
        block_m = M                                 # small-problem fallback
    num_tiles = M // block_m

    cost = pl.CostEstimate(
        flops=2 * M * H,
        transcendentals=0,
        bytes_accessed=M * 4 + M * H * 4 + H * 4 + 4 + M * 4,
    )

    out = pl.pallas_call(
        reward_kernel,
        out_shape=jax.ShapeDtypeStruct((M, 1), jnp.float32),
        grid_spec=pltpu.PrefetchScalarGridSpec(
            num_scalar_prefetch=1,
            grid=(num_tiles,),
            in_specs=[
                pl.BlockSpec(memory_space=pl.ANY),             # emb stays in HBM
                pl.BlockSpec((1, H), lambda i, ids: (0, 0)),   # folded weights
                pl.BlockSpec((1, 1), lambda i, ids: (0, 0)),   # folded bias
            ],
            out_specs=pl.BlockSpec((block_m, 1), lambda i, ids: (i, 0)),
            scratch_shapes=[
                pltpu.VMEM((block_m, H), jnp.float32),         # gather buffer
                pltpu.SemaphoreType.DMA(()),                   # shared DMA sem
            ],
        ),
        compiler_params=pltpu.CompilerParams(
            dimension_semantics=("parallel",),      # shard M tiles across TCs
        ),
        cost_estimate=cost,
    )(ids, emb, w_eff, b_eff)

    return out.reshape(B, S, 1)


def make_params(key, vocab_size, hidden):
    k1, k2, k3, k4, k5 = jax.random.split(key, 5)
    return {
        "emb":    jax.random.normal(k1, (vocab_size, hidden), jnp.float32) * 0.02,
        "w_sft":  jax.random.normal(k2, (hidden, vocab_size), jnp.float32) * 0.02,
        "b_sft":  jax.random.normal(k3, (1, vocab_size), jnp.float32) * 0.01,
        "w_last": jax.random.normal(k4, (vocab_size, 1), jnp.float32) * 0.02,
        "b_last": jax.random.normal(k5, (1, 1), jnp.float32) * 0.01,
    }


def reference_forward(x_tokens, params):
    """Unfolded f32 path matching the PyTorch module exactly."""
    e = params["emb"][x_tokens]                                 # (B, S, H)
    logits = e @ params["w_sft"] + params["b_sft"][0]           # (B, S, V)
    return logits @ params["w_last"] + params["b_last"][0, 0]   # (B, S, 1)


if __name__ == "__main__":
    # Small shapes: batch=2, seq=128, hidden=128, vocab_size=512
    # (M = 256 -> two 128-row tiles, exercising the tiled/parallel path).
    B, S, H, V = 2, 128, 128, 512

    key = jax.random.PRNGKey(0)
    k_tok, k_par = jax.random.split(key)
    x = jax.random.randint(k_tok, (B, S), 0, V, dtype=jnp.int32)
    params = make_params(k_par, V, H)

    out = jax.block_until_ready(reward_model_forward(x, params))
    ref = reference_forward(x, params)

    assert out.shape == (B, S, 1), out.shape
    # Fully f32 path (gather + accumulate in f32); only the head folding
    # reorders summation, so tolerance can be tight.
    max_err = float(jnp.max(jnp.abs(out - ref)))
    assert max_err < 1e-4, max_err
    print("KERNEL_OK")
</pallas_src>

<mosaic_0001>
module attributes {stable_mosaic.version = 11 : i64} {
  func.func @reward_kernel(%arg0: i32, %arg1: memref<256xi32, #tpu.memory_space<smem>>, %arg2: memref<512x128xf32, #tpu.memory_space<any>>, %arg3: memref<1x128xf32, #tpu.memory_space<vmem>>, %arg4: memref<1x1xf32, #tpu.memory_space<vmem>>, %arg5: memref<128x1xf32, #tpu.memory_space<vmem>>, %arg6: memref<128x128xf32, #tpu.memory_space<vmem>>, %arg7: memref<!tpu.dma_semaphore, #tpu.memory_space<semaphore_mem>>) attributes {dimension_semantics = [#tpu.dimension_semantics<parallel>], iteration_bounds = array<i64: 2>, scalar_prefetch = 1 : i64, scratch_operands = 2 : i64, tpu.core_type = #tpu.core_type<tc>, window_params = [{}, {pipeline_mode = #tpu.pipeline_mode<synchronous>, transform_indices = @transform_1, window_bounds = array<i64: 1, 128>}, {pipeline_mode = #tpu.pipeline_mode<synchronous>, transform_indices = @transform_2, window_bounds = array<i64: 1, 1>}, {transform_indices = @transform_3, window_bounds = array<i64: 128, 1>}]} {
    %c128_i32 = arith.constant 128 : i32
    %0 = arith.muli %arg0, %c128_i32 : i32
    %c0_i32 = arith.constant 0 : i32
    %c128_i32_0 = arith.constant 128 : i32
    %1 = arith.addi %c0_i32, %c128_i32_0 : i32
    %c1_i32 = arith.constant 1 : i32
    scf.for %arg8 = %c0_i32 to %1 step %c1_i32  : i32 {
      %c1_i32_13 = arith.constant 1 : i32
      %13 = arith.muli %arg8, %c1_i32_13 : i32
      %c0_i32_14 = arith.constant 0 : i32
      %14 = arith.addi %c0_i32_14, %13 : i32
      %15 = arith.addi %0, %14 : i32
      %16 = arith.index_cast %15 : i32 to index
      %17 = memref.load %arg1[%16] : memref<256xi32, #tpu.memory_space<smem>>
      %c0_i32_15 = arith.constant 0 : i32
      %18 = tpu.memref_slice %arg2[%17, %c0_i32_15] : memref<512x128xf32, #tpu.memory_space<any>> -> memref<1x128xf32, #tpu.memory_space<any>>
      %c0_i32_16 = arith.constant 0 : i32
      %19 = tpu.memref_slice %arg6[%14, %c0_i32_16] : memref<128x128xf32, #tpu.memory_space<vmem>> -> memref<1x128xf32, #tpu.memory_space<vmem>>
      tpu.enqueue_dma source(%18 : memref<1x128xf32, #tpu.memory_space<any>>) target(%19 : memref<1x128xf32, #tpu.memory_space<vmem>>) target_semaphore(%arg7 : memref<!tpu.dma_semaphore, #tpu.memory_space<semaphore_mem>>)
    }
    %c128_i32_1 = arith.constant 128 : i32
    %c0_i32_2 = arith.constant 0 : i32
    %c128_i32_3 = arith.constant 128 : i32
    %2 = arith.addi %c0_i32_2, %c128_i32_3 : i32
    %c1_i32_4 = arith.constant 1 : i32
    scf.for %arg8 = %c0_i32_2 to %2 step %c1_i32_4  : i32 {
      %c1_i32_13 = arith.constant 1 : i32
      %13 = arith.muli %arg8, %c1_i32_13 : i32
      %c0_i32_14 = arith.constant 0 : i32
      %14 = arith.addi %c0_i32_14, %13 : i32
      %c0_i32_15 = arith.constant 0 : i32
      %c0_i32_16 = arith.constant 0 : i32
      %15 = tpu.memref_slice %arg2[%c0_i32_15, %c0_i32_16] : memref<512x128xf32, #tpu.memory_space<any>> -> memref<1x128xf32, #tpu.memory_space<any>>
      %c0_i32_17 = arith.constant 0 : i32
      %16 = tpu.memref_slice %arg6[%14, %c0_i32_17] : memref<128x128xf32, #tpu.memory_space<vmem>> -> memref<1x128xf32, #tpu.memory_space<vmem>>
      tpu.wait_dma2 semaphore(%arg7 : memref<!tpu.dma_semaphore, #tpu.memory_space<semaphore_mem>>) src(%15 : memref<1x128xf32, #tpu.memory_space<any>>) dst(%16 : memref<1x128xf32, #tpu.memory_space<vmem>>)
    }
    %c128_i32_5 = arith.constant 128 : i32
    %c0 = arith.constant 0 : index
    %c0_6 = arith.constant 0 : index
    %3 = vector.load %arg6[%c0, %c0_6] : memref<128x128xf32, #tpu.memory_space<vmem>>, vector<128x128xf32>
    %c0_7 = arith.constant 0 : index
    %c0_8 = arith.constant 0 : index
    %4 = vector.load %arg3[%c0_7, %c0_8] : memref<1x128xf32, #tpu.memory_space<vmem>>, vector<1x128xf32>
    %5 = vector.broadcast %4 : vector<1x128xf32> to vector<128x128xf32>
    %6 = arith.mulf %3, %5 : vector<128x128xf32>
    %cst = arith.constant dense<0.000000e+00> : vector<128xf32>
    %7 = vector.multi_reduction <add>, %6, %cst [1] : vector<128x128xf32> to vector<128xf32>
    %8 = vector.shape_cast %7 : vector<128xf32> to vector<128x1xf32>
    %c0_9 = arith.constant 0 : index
    %c0_10 = arith.constant 0 : index
    %9 = vector.load %arg4[%c0_9, %c0_10] : memref<1x1xf32, #tpu.memory_space<vmem>>, vector<1x1xf32>
    %10 = vector.broadcast %9 : vector<1x1xf32> to vector<128x1xf32>
    %11 = arith.addf %8, %10 : vector<128x1xf32>
    %c0_11 = arith.constant 0 : index
    %c0_12 = arith.constant 0 : index
    %12 = vector.load %arg5[%c0_11, %c0_12] : memref<128x1xf32, #tpu.memory_space<vmem>>, vector<128x1xf32>
    tpu.vector_store %arg5[%c0_11, %c0_12], %11 {strides = array<i32>} : memref<128x1xf32, #tpu.memory_space<vmem>>, vector<128x1xf32>,
    return
  }
  func.func @transform_1(%arg0: i32, %arg1: memref<256xi32, #tpu.memory_space<smem>>) -> (i32, i32) {
    %c0_i32 = arith.constant 0 : i32
    %c0_i32_0 = arith.constant 0 : i32
    %c0_i32_1 = arith.constant 0 : i32
    return %c0_i32, %c0_i32_0 : i32, i32
  }
  func.func @transform_2(%arg0: i32, %arg1: memref<256xi32, #tpu.memory_space<smem>>) -> (i32, i32) {
    %c0_i32 = arith.constant 0 : i32
    %c0_i32_0 = arith.constant 0 : i32
    %c0_i32_1 = arith.constant 0 : i32
    return %c0_i32, %c0_i32_0 : i32, i32
  }
  func.func @transform_3(%arg0: i32, %arg1: memref<256xi32, #tpu.memory_space<smem>>) -> (i32, i32) {
    %c0_i32 = arith.constant 0 : i32
    %c0_i32_0 = arith.constant 0 : i32
    return %arg0, %c0_i32 : i32, i32
  }
}

</mosaic_0001>

<llo_original>
// kernel: tpu_custom_call.1
$region0: #{tpu_custom_call.1}
  #allocation0 [shape = 'u32[]', space=smem, size = 0x4, offset = 0x4, fixed_abs, tag = 'smem constant byte address 0x4 - core index']
  #allocation1 [shape = 'u32[72,128]{1,0:T(1,128)}', space=vmem, size = 0x9000, scoped, tag = 'internal scratch']
  #allocation2 [shape = 'f32[128,128]{1,0:T(8,128)}', space=vmem, size = 0x10000, scoped, tag = 'scratch operand']
  #allocation3 [shape = 's32[1]{0}', space=sflag, size = 0x4, scoped, tag = 'scratch operand']
  #allocation4 [shape = 's32[1]{0}', space=sflag, size = 0x4, scoped, tag = 'scoped memory for tpu_custom_call.1']
  #allocation5 [shape = 'u8[1024]{0}', space=smem, size = 0x400, scoped, tag = 'prefetched SMEM operand 0']
  #allocation6 [shape = 'f32[1,1]{1,0:T(1,128)S(1)}', space=vmem, size = 0x200, scoped, tag = 'scoped memory for tpu_custom_call.1']
  #allocation7 [shape = 's32[]', space=sflag, size = 0x4, offset = 0, fixed_abs, tag = 'sflag constant byte address 0x0 - dummy sync flag']
  #allocation8 [shape = 's32[]', space=sflag, size = 0x4, offset = 0, fixed_abs, tag = 'sflag constant byte address 0x0 - dummy sync flag']
  #allocation9 [shape = 'u32[]', space=smem, size = 0x4, offset = 0x44, fixed_abs, tag = 'smem constant byte address 0x44 - assertion arg 0']
  #allocation10 [shape = 'u32[]', space=smem, size = 0x4, offset = 0x48, fixed_abs, tag = 'smem constant byte address 0x48 - assertion arg 1']
  %s0 = inlined_call_operand.vmem [shape: s32[256], index: 0, kind: input, shape index: {}]
  %s1 = inlined_call_operand.hbm [shape: f32[512,128], index: 1, kind: input, shape index: {}]
  %s2 = inlined_call_operand.vmem [shape: f32[1,128], index: 2, kind: input, shape index: {}]
  %s3 = inlined_call_operand.<no memory space> [shape: f32[1,1], index: 3, kind: input, shape index: {}]
  %s4 = inlined_call_operand.vmem [shape: f32[256,1], index: 4, kind: output, shape index: {}]
  %s5 = sld [smem:[#allocation0]]
  $region59: #{tpu_custom_call.1} parent=0
    _
  %s7 = ssub.s32 1, %s5
  %s8 = scalar_select 0, %s7, %s5
  %s10 = sshll.u32 %s0, 4
  %s11 = int_to_ptr.vmem [resolvable:$true] %s10
  %13 = dma.vmem_to_smem %s11, 32, [#allocation5], [#allocation4]
  %v14 = vstv %s3
  %15 = vst [vmem:[#allocation6] sm:$0x1] %v14
  %17 = dma.done [#allocation4], 32
  %18 = sfence
  loop: start=0, step=1, limit=4
  $region2: #{tpu_custom_call.1} parent=0 // loop_pre_header
    _
  $region3: #{tpu_custom_call.1} parent=0 // loop_header
    %s20 = sphi 0, %s24
    %p21 = scmp.ge.s32.totalorder %s20, 4
    %s28 = sphi 0, %s28
    %s30 = sphi 0, %s28
    %s31 = sphi 0, %s30
    %s45 = sphi 0, %s31
    %s49 = sphi 0, %s49
    %s51 = sphi 0, %s49
    %s52 = sphi 0, %s51
    %s66 = sphi 0, %s52
    %s72 = sphi 0, %s74
    %s75 = sphi 0, %s72
    %s76 = sphi 0, %s75
    %s92 = sphi 0, %s76
  $region4: #{tpu_custom_call.1} parent=0 // loop_header_branch
    %23 = sbr.rel (%p21) target = $region8
  $region5: #{tpu_custom_call.1} parent=0 // loop_body
    %s25 = ssub.s32 %s20, 1
    %s26 = ssub.s32 %s20, 2
    %s27 = sadd.s32 %s20, 1
    %s29 = sadd.s32 %s28, 1
    %p32 = scmp.eq.s32.totalorder %s20, 1
    %p33 = scmp.ne.s32.totalorder %s28, %s30
    %p34 = scmp.eq.s32.totalorder %s20, 0
    %p35 = por %p33, %p34
    %p36 = scmp.ne.s32.totalorder %s28, %s30
    %p37 = scmp.eq.s32.totalorder %s25, 1
    %p38 = por %p36, %p37
    %p39 = scmp.ne.s32.totalorder %s30, %s31
    %p40 = scmp.eq.s32.totalorder %s25, 0
    %p41 = por %p39, %p40
    %p42 = scmp.ne.s32.totalorder %s30, %s31
    %p43 = scmp.eq.s32.totalorder %s26, 1
    %p44 = por %p42, %p43
    %p46 = scmp.ne.s32.totalorder %s31, %s45
    %p47 = scmp.eq.s32.totalorder %s26, 0
    %p48 = por %p46, %p47
    %s50 = sadd.s32 %s49, 1
    %p53 = scmp.eq.s32.totalorder %s20, 1
    %p54 = scmp.ne.s32.totalorder %s49, %s51
    %p55 = scmp.eq.s32.totalorder %s20, 0
    %p56 = por %p54, %p55
    %p57 = scmp.ne.s32.totalorder %s49, %s51
    %p58 = scmp.eq.s32.totalorder %s25, 1
    %p59 = por %p57, %p58
    %p60 = scmp.ne.s32.totalorder %s51, %s52
    %p61 = scmp.eq.s32.totalorder %s25, 0
    %p62 = por %p60, %p61
    %p63 = scmp.ne.s32.totalorder %s51, %s52
    %p64 = scmp.eq.s32.totalorder %s26, 1
    %p65 = por %p63, %p64
    %p67 = scmp.ne.s32.totalorder %s52, %s66
    %p68 = scmp.eq.s32.totalorder %s26, 0
    %p69 = por %p67, %p68
    %s70 = ssub.s32 %s20, %s27
    %p71 = scmp.eq.s32.totalorder %s70, 0
    %s73 = sadd.s32 %s72, 1
    %s74 = scalar_select %p71, %s72, %s73
    %p77 = pneg %p71
    %p78 = scmp.eq.s32.totalorder %s20, 1
    %p79 = por %p77, %p78
    %p80 = scmp.ne.s32.totalorder %s72, %s75
    %p81 = scmp.eq.s32.totalorder %s20, 0
    %p82 = por %p80, %p81
    %p83 = scmp.ne.s32.totalorder %s72, %s75
    %p84 = scmp.eq.s32.totalorder %s25, 1
    %p85 = por %p83, %p84
    %p86 = scmp.ne.s32.totalorder %s75, %s76
    %p87 = scmp.eq.s32.totalorder %s25, 0
    %p88 = por %p86, %p87
    %p89 = scmp.ne.s32.totalorder %s75, %s76
    %p90 = scmp.eq.s32.totalorder %s26, 1
    %p91 = por %p89, %p90
    %p93 = scmp.ne.s32.totalorder %s76, %s92
    %p94 = scmp.eq.s32.totalorder %s26, 0
    %p95 = por %p93, %p94
    %p96 = scmp.le.s32.totalorder 1, %s20
    %p97 = scmp.lt.s32.totalorder %s20, 3
    %p98 = pnand %p96, %p97
    %p99 = pneg %p98
    // Predicated region
    $region9: #{tpu_custom_call.1} parent=5 // pred_check
      _
    $region10: #{tpu_custom_call.1} parent=5 // pred_check_branch
      %101 = sbr.rel (%p98) target = $region12
    $region11: #{tpu_custom_call.1} parent=5 // pred_region
      %s102 = ssub.s32 %s20, 1
      // Predicated region
      $region13: #{tpu_custom_call.1} parent=11 // pred_check
        %p103 = pneg %p41
      $region14: #{tpu_custom_call.1} parent=11 // pred_check_branch
        %105 = sbr.rel (%p103) target = $region16
      $region15: #{tpu_custom_call.1} parent=11 // pred_region
        _
      $region16: #{tpu_custom_call.1} parent=11 // pred_fallthru
        _
      // Predicated region
      $region17: #{tpu_custom_call.1} parent=11 // pred_check
        %p106 = pneg %p62
      $region18: #{tpu_custom_call.1} parent=11 // pred_check_branch
        %108 = sbr.rel (%p106) target = $region20
      $region19: #{tpu_custom_call.1} parent=11 // pred_region
        _
      $region20: #{tpu_custom_call.1} parent=11 // pred_fallthru
        _
    $region12: #{tpu_custom_call.1} parent=5 // pred_fallthru
      _
    %p109 = scmp.lt.s32.totalorder %s20, 2
    // Predicated region
    $region21: #{tpu_custom_call.1} parent=5 // pred_check
      %p110 = pneg %p109
    $region22: #{tpu_custom_call.1} parent=5 // pred_check_branch
      %112 = sbr.rel (%p110) target = $region24
    $region23: #{tpu_custom_call.1} parent=5 // pred_region
      _
    $region24: #{tpu_custom_call.1} parent=5 // pred_fallthru
      _
    %p113 = scmp.le.s32.totalorder 1, %s20
    %p114 = scmp.lt.s32.totalorder %s20, 3
    %p115 = pnand %p113, %p114
    %p116 = pneg %p115
    // Predicated region
    $region25: #{tpu_custom_call.1} parent=5 // pred_check
      _
    $region26: #{tpu_custom_call.1} parent=5 // pred_check_branch
      %118 = sbr.rel (%p115) target = $region28
    $region27: #{tpu_custom_call.1} parent=5 // pred_region
      %s119 = ssub.s32 %s20, 1
      %p120 = pneg %p41
      %p121 = pneg %p38
      %p122 = pneg %p62
      %p123 = pneg %p59
      %p124 = pneg %p88
      %p125 = pneg %p85
      %s126 = smul.u32 16, %s25
      %p127 = scmp.lt.s32.totalorder %s126, 31
      %s128 = scalar_select %p127, %s126, 31
      %s129 = smul.addr %s128, 8
      %s130 = scalar_lea.vmem %s4, %s129
      %s131 = smul.u32 16, %s25
      %p132 = scmp.lt.s32.totalorder %s131, 31
      %s133 = scalar_select %p132, %s131, 31
      %s134 = smul.addr %s133, 8
      %s135 = scalar_lea.vmem %s4, %s134
      %s136 = smul.u32 16, %s25
      %s137 = smul.u32 %s25, 128
      loop: start=0, step=1, limit=128
      $region29: #{tpu_custom_call.1} parent=27 // loop_pre_header
        _
      $region30: #{tpu_custom_call.1} parent=27 // loop_header
        %s139 = sphi 0, %s143
        %p140 = scmp.ge.s32.totalorder %s139, 128
      $region31: #{tpu_custom_call.1} parent=27 // loop_header_branch
        %142 = sbr.rel (%p140) target = $region35
      $region32: #{tpu_custom_call.1} parent=27 // loop_body
        %s144 = sadd.s32 %s137, %s139
        %s145 = sld [smem:[#allocation5 + %s144]]
        %s146 = scalar_lea.hbm %s1, %s145
        %s147 = scalar_lea.vmem [#allocation2], %s139
        // Predicated region
        $region36: #{tpu_custom_call.1} parent=32 // pred_check
          _
        $region37: #{tpu_custom_call.1} parent=32 // pred_check_branch
          %149 = sbr.rel target = $region39
        $region38: #{tpu_custom_call.1} parent=32 // pred_region
          %150 = sst [smem:[#allocation9]] [#allocation8]
          %151 = sst [smem:[#allocation10]] [#allocation7]
        $region39: #{tpu_custom_call.1} parent=32 // pred_fallthru
          _
        %153 = shalt.err (0)
        %s155 = sshll.u32 %s146, 4
        %s156 = int_to_ptr.hbm [resolvable:$true] %s155
        %s157 = sshll.u32 %s147, 4
        %s158 = int_to_ptr.vmem [resolvable:$true] %s157
        %160 = dma.hbm_to_vmem [thread:$0]  %s156, 16, %s158, [#allocation3]
      $region33: #{tpu_custom_call.1} parent=27 // loop_footer
        %s143 = sadd.s32 1, %s139
      $region34: #{tpu_custom_call.1} parent=27 // loop_footer_branch
        %138 = sbr.rel target = $region30
      $region35: #{tpu_custom_call.1} parent=27 // loop_exit
        _
      loop: start=0, step=1, limit=128
      $region40: #{tpu_custom_call.1} parent=27 // loop_pre_header
        _
      $region41: #{tpu_custom_call.1} parent=27 // loop_header
        %s162 = sphi 0, %s166
        %p163 = scmp.ge.s32.totalorder %s162, 128
      $region42: #{tpu_custom_call.1} parent=27 // loop_header_branch
        %165 = sbr.rel (%p163) target = $region46
      $region43: #{tpu_custom_call.1} parent=27 // loop_body
        %s167 = smul.u32 1, 1
        %s168 = sshll.u32 %s167, 4
        %169 = dma.done [#allocation3], %s168
      $region44: #{tpu_custom_call.1} parent=27 // loop_footer
        %s166 = sadd.s32 1, %s162
      $region45: #{tpu_custom_call.1} parent=27 // loop_footer_branch
        %161 = sbr.rel target = $region41
      $region46: #{tpu_custom_call.1} parent=27 // loop_exit
        _
      %v170 = vld [vmem:[#allocation2] sm:$0xff]
      %v171 = vld [vmem:[#allocation2 + $0x8] sm:$0xff]
      %v172 = vld [vmem:[#allocation2 + $0x10] sm:$0xff]
      %v173 = vld [vmem:[#allocation2 + $0x18] sm:$0xff]
      %v174 = vld [vmem:[#allocation2 + $0x20] sm:$0xff]
      %v175 = vld [vmem:[#allocation2 + $0x28] sm:$0xff]
      %v176 = vld [vmem:[#allocation2 + $0x30] sm:$0xff]
      %v177 = vld [vmem:[#allocation2 + $0x38] sm:$0xff]
      %v178 = vld [vmem:[#allocation2 + $0x40] sm:$0xff]
      %v179 = vld [vmem:[#allocation2 + $0x48] sm:$0xff]
      %v180 = vld [vmem:[#allocation2 + $0x50] sm:$0xff]
      %v181 = vld [vmem:[#allocation2 + $0x58] sm:$0xff]
      %v182 = vld [vmem:[#allocation2 + $0x60] sm:$0xff]
      %v183 = vld [vmem:[#allocation2 + $0x68] sm:$0xff]
      %v184 = vld [vmem:[#allocation2 + $0x70] sm:$0xff]
      %v185 = vld [vmem:[#allocation2 + $0x78] sm:$0xff]
      %v186 = vld [vmem:[%s2] sm:$0x1]
      %v188 = vperm.slane %v186, 0
      %v190 = vmul.f32 %v170, %v188
      %v191 = vmul.f32 %v171, %v188
      %v192 = vmul.f32 %v172, %v188
      %v193 = vmul.f32 %v173, %v188
      %v194 = vmul.f32 %v174, %v188
      %v195 = vmul.f32 %v175, %v188
      %v196 = vmul.f32 %v176, %v188
      %v197 = vmul.f32 %v177, %v188
      %v198 = vmul.f32 %v178, %v188
      %v199 = vmul.f32 %v179, %v188
      %v200 = vmul.f32 %v180, %v188
      %v201 = vmul.f32 %v181, %v188
      %v202 = vmul.f32 %v182, %v188
      %v203 = vmul.f32 %v183, %v188
      %v204 = vmul.f32 %v184, %v188
      %v205 = vmul.f32 %v185, %v188
      %206 = vadd.xlane.f32.xlu0 %v190
      %v207 = vpop.xlane.xlu0 %206
      %208 = vadd.xlane.f32.xlu0 %v191
      %v209 = vpop.xlane.xlu0 %208
      %210 = vadd.xlane.f32.xlu0 %v192
      %v211 = vpop.xlane.xlu0 %210
      %212 = vadd.xlane.f32.xlu0 %v193
      %v213 = vpop.xlane.xlu0 %212
      %214 = vadd.xlane.f32.xlu0 %v194
      %v215 = vpop.xlane.xlu0 %214
      %216 = vadd.xlane.f32.xlu0 %v195
      %v217 = vpop.xlane.xlu0 %216
      %218 = vadd.xlane.f32.xlu0 %v196
      %v219 = vpop.xlane.xlu0 %218
      %220 = vadd.xlane.f32.xlu0 %v197
      %v221 = vpop.xlane.xlu0 %220
      %222 = vadd.xlane.f32.xlu0 %v198
      %v223 = vpop.xlane.xlu0 %222
      %224 = vadd.xlane.f32.xlu0 %v199
      %v225 = vpop.xlane.xlu0 %224
      %226 = vadd.xlane.f32.xlu0 %v200
      %v227 = vpop.xlane.xlu0 %226
      %228 = vadd.xlane.f32.xlu0 %v201
      %v229 = vpop.xlane.xlu0 %228
      %230 = vadd.xlane.f32.xlu0 %v202
      %v231 = vpop.xlane.xlu0 %230
      %232 = vadd.xlane.f32.xlu0 %v203
      %v233 = vpop.xlane.xlu0 %232
      %234 = vadd.xlane.f32.xlu0 %v204
      %v235 = vpop.xlane.xlu0 %234
      %236 = vadd.xlane.f32.xlu0 %v205
      %v237 = vpop.xlane.xlu0 %236
      %v238 = vld [vmem:[#allocation6] sm:$0x1]
      %v240 = vperm.slane %v238, 0
      %v242 = vadd.f32 %v207, %v240
      %v243 = vadd.f32 %v209, %v240
      %v244 = vadd.f32 %v211, %v240
      %v245 = vadd.f32 %v213, %v240
      %v246 = vadd.f32 %v215, %v240
      %v247 = vadd.f32 %v217, %v240
      %v248 = vadd.f32 %v219, %v240
      %v249 = vadd.f32 %v221, %v240
      %v250 = vadd.f32 %v223, %v240
      %v251 = vadd.f32 %v225, %v240
      %v252 = vadd.f32 %v227, %v240
      %v253 = vadd.f32 %v229, %v240
      %v254 = vadd.f32 %v231, %v240
      %v255 = vadd.f32 %v233, %v240
      %v256 = vadd.f32 %v235, %v240
      %v257 = vadd.f32 %v237, %v240
      %vm258 = vcmask 7168
      %259 = vst.msk [vmem:[%s135] sm:$0xff] %vm258, %v242
      %260 = vst.msk [vmem:[%s135 + $0x8] sm:$0xff] %vm258, %v243
      %261 = vst.msk [vmem:[%s135 + $0x10] sm:$0xff] %vm258, %v244
      %262 = vst.msk [vmem:[%s135 + $0x18] sm:$0xff] %vm258, %v245
      %263 = vst.msk [vmem:[%s135 + $0x20] sm:$0xff] %vm258, %v246
      %264 = vst.msk [vmem:[%s135 + $0x28] sm:$0xff] %vm258, %v247
      %265 = vst.msk [vmem:[%s135 + $0x30] sm:$0xff] %vm258, %v248
      %266 = vst.msk [vmem:[%s135 + $0x38] sm:$0xff] %vm258, %v249
      %267 = vst.msk [vmem:[%s135 + $0x40] sm:$0xff] %vm258, %v250
      %268 = vst.msk [vmem:[%s135 + $0x48] sm:$0xff] %vm258, %v251
      %269 = vst.msk [vmem:[%s135 + $0x50] sm:$0xff] %vm258, %v252
      %270 = vst.msk [vmem:[%s135 + $0x58] sm:$0xff] %vm258, %v253
      %271 = vst.msk [vmem:[%s135 + $0x60] sm:$0xff] %vm258, %v254
      %272 = vst.msk [vmem:[%s135 + $0x68] sm:$0xff] %vm258, %v255
      %273 = vst.msk [vmem:[%s135 + $0x70] sm:$0xff] %vm258, %v256
      %274 = vst.msk [vmem:[%s135 + $0x78] sm:$0xff] %vm258, %v257
      %s275 = smul.u32 16, %s25
      %p276 = scmp.lt.s32.totalorder %s275, 31
      %s277 = scalar_select %p276, %s275, 31
      %s278 = smul.addr %s277, 8
      %s279 = scalar_lea.vmem %s4, %s278
      // Predicated region
      $region47: #{tpu_custom_call.1} parent=27 // pred_check
        %p280 = pneg %p85
      $region48: #{tpu_custom_call.1} parent=27 // pred_check_branch
        %282 = sbr.rel (%p280) target = $region50
      $region49: #{tpu_custom_call.1} parent=27 // pred_region
        %s283 = smul.u32 16, %s25
      $region50: #{tpu_custom_call.1} parent=27 // pred_fallthru
        _
    $region28: #{tpu_custom_call.1} parent=5 // pred_fallthru
      _
    %p284 = scmp.le.s32.totalorder 2, %s20
    // Predicated region
    $region51: #{tpu_custom_call.1} parent=5 // pred_check
      %p285 = pneg %p284
    $region52: #{tpu_custom_call.1} parent=5 // pred_check_branch
      %287 = sbr.rel (%p285) target = $region54
    $region53: #{tpu_custom_call.1} parent=5 // pred_region
      %s288 = ssub.s32 %s20, 2
      // Predicated region
      $region55: #{tpu_custom_call.1} parent=53 // pred_check
        %p289 = pneg %p91
      $region56: #{tpu_custom_call.1} parent=53 // pred_check_branch
        %291 = sbr.rel (%p289) target = $region58
      $region57: #{tpu_custom_call.1} parent=53 // pred_region
        %s292 = smul.u32 16, %s26
        %p293 = scmp.lt.s32.totalorder %s292, 31
        %s294 = scalar_select %p293, %s292, 31
        %s295 = smul.addr %s294, 8
        %s296 = scalar_lea.vmem %s4, %s295
      $region58: #{tpu_custom_call.1} parent=53 // pred_fallthru
        _
    $region54: #{tpu_custom_call.1} parent=5 // pred_fallthru
      _
  $region6: #{tpu_custom_call.1} parent=0 // loop_footer
    %s24 = sadd.s32 1, %s20
  $region7: #{tpu_custom_call.1} parent=0 // loop_footer_branch
    %19 = sbr.rel target = $region3
  $region8: #{tpu_custom_call.1} parent=0 // loop_exit
    _
  %297 = vsyncmov [#allocation3]
  %s298 = vpop.sfrf %297
  %p299 = scmp.eq.s32.totalorder %s298, 0
  %p300 = pneg %p299
  %302 = shalt.err (%p300)

</llo_original>
